<compile_context>
chip_gen: v7x
topology: tpu7x:2x2x1
jax: 0.10.0
libtpu: 0.0.40
codegen_flags: <defaults>
</compile_context>

<pallas_src>
import jax
import jax.numpy as jnp
from jax.experimental import pallas as pl
from jax.experimental.pallas import tpu as pltpu


def _make_fused_kernel(Cin, C0, C1, KK1, NB, SH, SO, Wout, Q, taps1, tc,
                       compute_dtype):
    """Fused ResidualBlock kernel for NB batch elements per grid step.

    Ref order: xs_ref, w0_ref, b0_ref, w1_ref, b1_ref, mask_ref, o_ref, st_ref
      xs_ref  : (1, K0*K0*Cin, NB*SH)   im2col-stacked conv0 input (haloed,
                 pitch-Wp flattened, per-element lane stride SH)
      w0_ref  : (C0, K0*K0*Cin)         conv0 weights, taps stacked along cols
      b0_ref  : (C0, 1)                 f32
      w1_ref  : (C1, K1*K1*C0 + Cin)    conv1 weights ++ 1x1 shortcut weights
      b1_ref  : (C1, 1)                 f32
      mask_ref: (1, NB*SH)              1.0 on valid h columns, else 0.0
      o_ref   : (1, C1, NB*SO)          lane-dense output block
      st_ref  : (K1*K1*C0 + Cin, NB*SO) f32 VMEM conv1 im2col stack
    """
    R = KK1 * C0 + Cin

    def kernel(xs_ref, w0_ref, b0_ref, w1_ref, b1_ref, mask_ref, o_ref,
               st_ref):
        # One-time zero of the conv1-stack scratch.  Only the (SO - Wout) junk
        # pad columns of each element depend on it, and those only ever feed
        # output columns the wrapper strips; the valid columns are fully
        # rewritten every grid step (so this stays safe when the 'parallel'
        # grid is split across TensorCores).
        @pl.when(pl.program_id(0) == 0)
        def _():
            st_ref[...] = jnp.zeros_like(st_ref)

        xs = xs_ref[0]                                    # (K0*K0*Cin, NB*SH)

        # ---- conv0 (+bias, ReLU, SAME-padding mask): ONE MXU matmul --------
        acc0 = jnp.dot(w0_ref[...], xs, preferred_element_type=jnp.float32)
        h = jnp.maximum(acc0 + b0_ref[...], 0.0) * mask_ref[...]  # (C0, NB*SH)

        # ---- build the conv1 im2col stack (+ shortcut rows) in VMEM --------
        # Destination slices all start at 8-row boundaries; sources are lane
        # shifted slices of the conv0 VALUE (no h staging round trip).
        for b in range(NB):
            hb, ob = b * SH, b * SO
            for t, s in enumerate(taps1):
                st_ref[t * C0:(t + 1) * C0, ob:ob + Wout] = \
                    h[:, hb + s:hb + s + Wout]
            # Center-tap input rows drive the 1x1 shortcut inside the same
            # matmul as conv1 (their weights are the last Cin columns of w1).
            st_ref[KK1 * C0:R, ob:ob + Wout] = (
                xs[tc * Cin:(tc + 1) * Cin,
                   hb + Q:hb + Q + Wout].astype(jnp.float32))

        # ---- conv1 + 1x1 shortcut: ONE MXU matmul; bias + final ReLU -------
        acc1 = jnp.dot(w1_ref[...], st_ref[...].astype(compute_dtype),
                       preferred_element_type=jnp.float32)
        o_ref[0] = jnp.maximum(acc1 + b1_ref[...], 0.0).astype(o_ref.dtype)

    return kernel


def make_residual_block_forward(params, x_shape, *, elems_per_step=None,
                                compute_dtype=jnp.bfloat16):
    """Build a jitted ResidualBlock forward for a fixed input shape.

    All parameter repacking (weight transposes/stacking, bias reshapes, the
    SAME-padding validity mask) happens HERE, once; the returned function's
    per-call work is just the input pad / im2col stack and the single fused
    Pallas kernel.

    params (HWIO conv weights):
      w0 (K,K,Cin,C0), b0 (C0,), w1 (K,K,C0,C1), b1 (C1,),
      wsc (1,1,Cin,C1)  -- omit / None when in_channels == channels[-1]
                           (identity shortcut).
    """
    N, Cin, H, W = map(int, x_shape)
    w0h, w1h = jnp.asarray(params["w0"]), jnp.asarray(params["w1"])
    K0, C0 = int(w0h.shape[0]), int(w0h.shape[3])
    K1, C1 = int(w1h.shape[0]), int(w1h.shape[3])
    assert K0 % 2 == 1 and K1 % 2 == 1
    P0, P1 = (K0 - 1) // 2, (K1 - 1) // 2
    assert P0 == P1, "fused kernel assumes equal SAME padding for both convs"
    P = P0

    # ---- pitch / halo geometry (all static Python ints) --------------------
    Wp = W + 2 * P              # padded row pitch: the 2P junk cols double as
                                # the left+right SAME padding between rows
    Wout = H * Wp               # flattened pitch-layout width of one image
    Q = P * Wp + P              # flat offset of pixel (0,0) in the padded image
    Whalo = Wout + 2 * Q        # conv0 is evaluated over this haloed window
    SH = pl.cdiv(Whalo, 128) * 128   # per-element lane stride (conv0 side)
    SO = pl.cdiv(Wout, 128) * 128    # per-element lane stride (output side)
    KK0, KK1 = K0 * K0, K1 * K1
    R = KK1 * C0 + Cin
    Lx = (H + 2 * P) * Wp
    taps0 = tuple(kh * Wp + kw for kh in range(K0) for kw in range(K0))
    taps1 = tuple(kh * Wp + kw for kh in range(K1) for kw in range(K1))
    tc = P * K0 + P             # conv0-stack index of the centre tap

    # ---- batch folding: NB elements per grid step, grid kept even for v7x --
    if elems_per_step is None:
        if N >= 8 and N % 4 == 0:
            elems_per_step = N // 4   # >=2 steps per v7x core -> DMA overlap
        elif N % 2 == 0:
            elems_per_step = N // 2   # one step per v7x TensorCore
        else:
            elems_per_step = 1
    NB = int(elems_per_step)
    assert N % NB == 0
    G = N // NB

    # ---- one-time parameter repacking (hoisted off the per-call path) ------
    w0c = (jnp.transpose(w0h, (3, 0, 1, 2))
           .reshape(C0, KK0 * Cin).astype(compute_dtype))
    w1s = jnp.transpose(w1h, (3, 0, 1, 2)).reshape(C1, KK1 * C0)
    wsc = params.get("wsc", None)
    if wsc is None:                   # identity shortcut
        assert Cin == C1, "identity shortcut needs in_channels == channels[-1]"
        wsc_m = jnp.eye(C1, dtype=w1s.dtype)
    else:
        wsc_m = jnp.transpose(jnp.asarray(wsc).reshape(Cin, C1), (1, 0))
    w1e = jnp.concatenate([w1s, wsc_m], axis=1).astype(compute_dtype)  # (C1,R)
    b0 = jnp.asarray(params["b0"]).reshape(C0, 1).astype(jnp.float32)
    b1 = jnp.asarray(params["b1"]).reshape(C1, 1).astype(jnp.float32)
    # SAME-padding validity mask over the haloed, pitch-flattened columns.
    j = jnp.arange(SH) - Q
    valid = (j >= 0) & (j < Wout) & (j % Wp < W)
    mask = jnp.tile(valid.astype(jnp.float32)[None, :], (1, NB))  # (1, NB*SH)

    kernel = _make_fused_kernel(Cin, C0, C1, KK1, NB, SH, SO, Wout, Q, taps1,
                                tc, compute_dtype)

    in_specs = [
        pl.BlockSpec((1, KK0 * Cin, NB * SH), lambda g: (g, 0, 0)),
        pl.BlockSpec((C0, KK0 * Cin), lambda g: (0, 0)),
        pl.BlockSpec((C0, 1), lambda g: (0, 0)),
        pl.BlockSpec((C1, R), lambda g: (0, 0)),
        pl.BlockSpec((C1, 1), lambda g: (0, 0)),
        pl.BlockSpec((1, NB * SH), lambda g: (0, 0)),
    ]
    out_spec = pl.BlockSpec((1, C1, NB * SO), lambda g: (g, 0, 0))

    @jax.jit
    def forward(x):
        assert x.shape == (N, Cin, H, W)
        # Per-call input prep: spatial SAME pad, flatten to the pitch-Wp
        # layout, im2col-stack the K*K taps along the channel axis, fold the
        # batch into the lane axis (stride SH), cast to the MXU dtype.
        xpad = jnp.pad(x, ((0, 0), (0, 0), (P, P), (P, P))).reshape(N, Cin, Lx)
        xext = jnp.pad(xpad, ((0, 0), (0, 0), (Q, Q + Whalo - Lx)))
        xstk = jnp.concatenate([xext[:, :, s:s + Whalo] for s in taps0],
                               axis=1)
        xstk = jnp.pad(xstk, ((0, 0), (0, 0), (0, SH - Whalo)))
        xs = (xstk.reshape(G, NB, KK0 * Cin, SH)
              .transpose(0, 2, 1, 3)
              .reshape(G, KK0 * Cin, NB * SH)
              .astype(compute_dtype))

        out = pl.pallas_call(
            kernel,
            out_shape=jax.ShapeDtypeStruct((G, C1, NB * SO), x.dtype),
            grid=(G,),
            in_specs=in_specs,
            out_specs=out_spec,
            scratch_shapes=[pltpu.VMEM((R, NB * SO), jnp.float32)],
            compiler_params=pltpu.CompilerParams(
                dimension_semantics=("parallel",)),
        )(xs, w0c, b0, w1e, b1, mask)

        # Strip the pitch/pad junk columns: (G, C1, NB*SO) -> (N, C1, H, W).
        out = (out.reshape(G, C1, NB, SO)
               .transpose(0, 2, 1, 3)
               .reshape(N, C1, SO)[:, :, :Wout]
               .reshape(N, C1, H, Wp)[:, :, :, :W])
        return out

    return forward


def _reference(x_nchw, p):
    """Pure-JAX (XLA conv) f32 reference with the module's semantics."""
    x = jnp.transpose(x_nchw, (0, 2, 3, 1))
    dn = ("NHWC", "HWIO", "NHWC")
    conv = lambda a, w: jax.lax.conv_general_dilated(
        a, w, window_strides=(1, 1), padding="SAME", dimension_numbers=dn)
    h = jax.nn.relu(conv(x, p["w0"]) + p["b0"])
    main = conv(h, p["w1"]) + p["b1"]
    sc = conv(x, p["wsc"])
    out = jax.nn.relu(main + sc)
    return jnp.transpose(out, (0, 3, 1, 2))


if __name__ == "__main__":
    key = jax.random.PRNGKey(0)
    N, Cin, H, W = 2, 4, 16, 16
    channels = [8, 8]
    ksizes = [3, 3]

    ks = jax.random.split(key, 6)
    x = jax.random.normal(ks[0], (N, Cin, H, W), jnp.float32)
    # Deterministic synthetic parameters (HWIO weight layout).
    params = {
        "w0": 0.1 * jax.random.normal(
            ks[1], (ksizes[0], ksizes[0], Cin, channels[0]), jnp.float32),
        "b0": 0.1 * jax.random.normal(ks[2], (channels[0],), jnp.float32),
        "w1": 0.1 * jax.random.normal(
            ks[3], (ksizes[1], ksizes[1], channels[0], channels[1]),
            jnp.float32),
        "b1": 0.1 * jax.random.normal(ks[4], (channels[1],), jnp.float32),
        "wsc": 0.1 * jax.random.normal(
            ks[5], (1, 1, Cin, channels[1]), jnp.float32),
    }

    forward = make_residual_block_forward(params, x.shape)
    out = jax.block_until_ready(forward(x))

    ref = _reference(x, params)
    assert out.shape == (N, channels[-1], H, W), out.shape
    # bf16 MXU operands (with f32 accumulation) -> loosened tolerance vs the
    # pure-f32 XLA reference.
    assert bool(jnp.allclose(out, ref, atol=2e-2, rtol=2e-2)), (
        "mismatch vs reference, max|diff|=%f" %
        float(jnp.max(jnp.abs(out - ref))))
    print("KERNEL_OK")
</pallas_src>

<mosaic_0001>
module attributes {stable_mosaic.version = 11 : i64} {
  func.func @kernel(%arg0: i32, %arg1: memref<1x36x384xbf16, #tpu.memory_space<vmem>>, %arg2: memref<8x36xbf16, #tpu.memory_space<vmem>>, %arg3: memref<8x1xf32, #tpu.memory_space<vmem>>, %arg4: memref<8x76xbf16, #tpu.memory_space<vmem>>, %arg5: memref<8x1xf32, #tpu.memory_space<vmem>>, %arg6: memref<1x384xf32, #tpu.memory_space<vmem>>, %arg7: memref<1x8x384xf32, #tpu.memory_space<vmem>>, %arg8: memref<76x384xf32, #tpu.memory_space<vmem>>) attributes {dimension_semantics = [#tpu.dimension_semantics<parallel>], iteration_bounds = array<i64: 2>, scalar_prefetch = 0 : i64, scratch_operands = 1 : i64, tpu.core_type = #tpu.core_type<tc>, window_params = [{transform_indices = @transform_0, window_bounds = array<i64: 1, 36, 384>}, {pipeline_mode = #tpu.pipeline_mode<synchronous>, transform_indices = @transform_1, window_bounds = array<i64: 8, 36>}, {pipeline_mode = #tpu.pipeline_mode<synchronous>, transform_indices = @transform_2, window_bounds = array<i64: 8, 1>}, {pipeline_mode = #tpu.pipeline_mode<synchronous>, transform_indices = @transform_3, window_bounds = array<i64: 8, 76>}, {pipeline_mode = #tpu.pipeline_mode<synchronous>, transform_indices = @transform_4, window_bounds = array<i64: 8, 1>}, {pipeline_mode = #tpu.pipeline_mode<synchronous>, transform_indices = @transform_5, window_bounds = array<i64: 1, 384>}, {transform_indices = @transform_6, window_bounds = array<i64: 1, 8, 384>}]} {
    %c0_i32 = arith.constant 0 : i32
    %0 = arith.cmpi eq, %arg0, %c0_i32 : i32
    %1 = arith.extui %0 : i1 to i32
    %c0_i32_0 = arith.constant 0 : i32
    %2 = arith.cmpi ne, %1, %c0_i32_0 : i32
    scf.if %2 {
      %cst_32 = arith.constant 0.000000e+00 : f32
      %48 = vector.broadcast %cst_32 : f32 to vector<76x384xf32>
      %c0_33 = arith.constant 0 : index
      %c0_34 = arith.constant 0 : index
      %49 = vector.load %arg8[%c0_33, %c0_34] : memref<76x384xf32, #tpu.memory_space<vmem>>, vector<76x384xf32>
      tpu.vector_store %arg8[%c0_33, %c0_34], %48 {strides = array<i32>} : memref<76x384xf32, #tpu.memory_space<vmem>>, vector<76x384xf32>,
    } else {
    }
    %c0 = arith.constant 0 : index
    %c0_1 = arith.constant 0 : index
    %c0_2 = arith.constant 0 : index
    %3 = vector.load %arg1[%c0, %c0_1, %c0_2] : memref<1x36x384xbf16, #tpu.memory_space<vmem>>, vector<1x36x384xbf16>
    %4 = vector.shape_cast %3 : vector<1x36x384xbf16> to vector<36x384xbf16>
    %c0_3 = arith.constant 0 : index
    %c0_4 = arith.constant 0 : index
    %5 = vector.load %arg2[%c0_3, %c0_4] : memref<8x36xbf16, #tpu.memory_space<vmem>>, vector<8x36xbf16>
    %cst = arith.constant dense<0.000000e+00> : vector<8x384xf32>
    %6 = tpu.matmul %5, %4, %cst {dimension_numbers = #tpu.dot_dimension_numbers<[1], [0], [0], [1], [0, 0, 1, 1], [], []>} : vector<8x36xbf16>, vector<36x384xbf16>, vector<8x384xf32> -> vector<8x384xf32>
    %c0_5 = arith.constant 0 : index
    %c0_6 = arith.constant 0 : index
    %7 = vector.load %arg3[%c0_5, %c0_6] : memref<8x1xf32, #tpu.memory_space<vmem>>, vector<8x1xf32>
    %8 = vector.broadcast %7 : vector<8x1xf32> to vector<8x384xf32>
    %9 = arith.addf %6, %8 : vector<8x384xf32>
    %cst_7 = arith.constant 0.000000e+00 : f32
    %10 = vector.broadcast %cst_7 : f32 to vector<8x384xf32>
    %11 = arith.maximumf %9, %10 : vector<8x384xf32>
    %c0_8 = arith.constant 0 : index
    %c0_9 = arith.constant 0 : index
    %12 = vector.load %arg6[%c0_8, %c0_9] : memref<1x384xf32, #tpu.memory_space<vmem>>, vector<1x384xf32>
    %13 = vector.broadcast %12 : vector<1x384xf32> to vector<8x384xf32>
    %14 = arith.mulf %11, %13 : vector<8x384xf32>
    %15 = vector.extract_strided_slice %14 {offsets = [0, 0], sizes = [8, 288], strides = [1, 1]} : vector<8x384xf32> to vector<8x288xf32>
    %c0_10 = arith.constant 0 : index
    %c0_11 = arith.constant 0 : index
    %16 = vector.load %arg8[%c0_10, %c0_11] : memref<76x384xf32, #tpu.memory_space<vmem>>, vector<8x288xf32>
    tpu.vector_store %arg8[%c0_10, %c0_11], %15 {strides = array<i32>} : memref<76x384xf32, #tpu.memory_space<vmem>>, vector<8x288xf32>,
    %17 = vector.extract_strided_slice %14 {offsets = [0, 1], sizes = [8, 288], strides = [1, 1]} : vector<8x384xf32> to vector<8x288xf32>
    %c8 = arith.constant 8 : index
    %c0_12 = arith.constant 0 : index
    %18 = vector.load %arg8[%c8, %c0_12] : memref<76x384xf32, #tpu.memory_space<vmem>>, vector<8x288xf32>
    tpu.vector_store %arg8[%c8, %c0_12], %17 {strides = array<i32>} : memref<76x384xf32, #tpu.memory_space<vmem>>, vector<8x288xf32>,
    %19 = vector.extract_strided_slice %14 {offsets = [0, 2], sizes = [8, 288], strides = [1, 1]} : vector<8x384xf32> to vector<8x288xf32>
    %c16 = arith.constant 16 : index
    %c0_13 = arith.constant 0 : index
    %20 = vector.load %arg8[%c16, %c0_13] : memref<76x384xf32, #tpu.memory_space<vmem>>, vector<8x288xf32>
    tpu.vector_store %arg8[%c16, %c0_13], %19 {strides = array<i32>} : memref<76x384xf32, #tpu.memory_space<vmem>>, vector<8x288xf32>,
    %21 = vector.extract_strided_slice %14 {offsets = [0, 18], sizes = [8, 288], strides = [1, 1]} : vector<8x384xf32> to vector<8x288xf32>
    %c24 = arith.constant 24 : index
    %c0_14 = arith.constant 0 : index
    %22 = vector.load %arg8[%c24, %c0_14] : memref<76x384xf32, #tpu.memory_space<vmem>>, vector<8x288xf32>
    tpu.vector_store %arg8[%c24, %c0_14], %21 {strides = array<i32>} : memref<76x384xf32, #tpu.memory_space<vmem>>, vector<8x288xf32>,
    %23 = vector.extract_strided_slice %14 {offsets = [0, 19], sizes = [8, 288], strides = [1, 1]} : vector<8x384xf32> to vector<8x288xf32>
    %c32 = arith.constant 32 : index
    %c0_15 = arith.constant 0 : index
    %24 = vector.load %arg8[%c32, %c0_15] : memref<76x384xf32, #tpu.memory_space<vmem>>, vector<8x288xf32>
    tpu.vector_store %arg8[%c32, %c0_15], %23 {strides = array<i32>} : memref<76x384xf32, #tpu.memory_space<vmem>>, vector<8x288xf32>,
    %25 = vector.extract_strided_slice %14 {offsets = [0, 20], sizes = [8, 288], strides = [1, 1]} : vector<8x384xf32> to vector<8x288xf32>
    %c40 = arith.constant 40 : index
    %c0_16 = arith.constant 0 : index
    %26 = vector.load %arg8[%c40, %c0_16] : memref<76x384xf32, #tpu.memory_space<vmem>>, vector<8x288xf32>
    tpu.vector_store %arg8[%c40, %c0_16], %25 {strides = array<i32>} : memref<76x384xf32, #tpu.memory_space<vmem>>, vector<8x288xf32>,
    %27 = vector.extract_strided_slice %14 {offsets = [0, 36], sizes = [8, 288], strides = [1, 1]} : vector<8x384xf32> to vector<8x288xf32>
    %c48 = arith.constant 48 : index
    %c0_17 = arith.constant 0 : index
    %28 = vector.load %arg8[%c48, %c0_17] : memref<76x384xf32, #tpu.memory_space<vmem>>, vector<8x288xf32>
    tpu.vector_store %arg8[%c48, %c0_17], %27 {strides = array<i32>} : memref<76x384xf32, #tpu.memory_space<vmem>>, vector<8x288xf32>,
    %29 = vector.extract_strided_slice %14 {offsets = [0, 37], sizes = [8, 288], strides = [1, 1]} : vector<8x384xf32> to vector<8x288xf32>
    %c56 = arith.constant 56 : index
    %c0_18 = arith.constant 0 : index
    %30 = vector.load %arg8[%c56, %c0_18] : memref<76x384xf32, #tpu.memory_space<vmem>>, vector<8x288xf32>
    tpu.vector_store %arg8[%c56, %c0_18], %29 {strides = array<i32>} : memref<76x384xf32, #tpu.memory_space<vmem>>, vector<8x288xf32>,
    %31 = vector.extract_strided_slice %14 {offsets = [0, 38], sizes = [8, 288], strides = [1, 1]} : vector<8x384xf32> to vector<8x288xf32>
    %c64 = arith.constant 64 : index
    %c0_19 = arith.constant 0 : index
    %32 = vector.load %arg8[%c64, %c0_19] : memref<76x384xf32, #tpu.memory_space<vmem>>, vector<8x288xf32>
    tpu.vector_store %arg8[%c64, %c0_19], %31 {strides = array<i32>} : memref<76x384xf32, #tpu.memory_space<vmem>>, vector<8x288xf32>,
    %33 = vector.extract_strided_slice %4 {offsets = [16, 19], sizes = [4, 288], strides = [1, 1]} : vector<36x384xbf16> to vector<4x288xbf16>
    %34 = arith.extf %33 : vector<4x288xbf16> to vector<4x288xf32>
    %c72 = arith.constant 72 : index
    %c0_20 = arith.constant 0 : index
    %35 = vector.load %arg8[%c72, %c0_20] : memref<76x384xf32, #tpu.memory_space<vmem>>, vector<4x288xf32>
    tpu.vector_store %arg8[%c72, %c0_20], %34 {strides = array<i32>} : memref<76x384xf32, #tpu.memory_space<vmem>>, vector<4x288xf32>,
    %c0_21 = arith.constant 0 : index
    %c0_22 = arith.constant 0 : index
    %36 = vector.load %arg4[%c0_21, %c0_22] : memref<8x76xbf16, #tpu.memory_space<vmem>>, vector<8x76xbf16>
    %c0_23 = arith.constant 0 : index
    %c0_24 = arith.constant 0 : index
    %37 = vector.load %arg8[%c0_23, %c0_24] : memref<76x384xf32, #tpu.memory_space<vmem>>, vector<76x384xf32>
    %38 = arith.truncf %37 : vector<76x384xf32> to vector<76x384xbf16>
    %cst_25 = arith.constant dense<0.000000e+00> : vector<8x384xf32>
    %39 = tpu.matmul %36, %38, %cst_25 {dimension_numbers = #tpu.dot_dimension_numbers<[1], [0], [0], [1], [0, 0, 1, 1], [], []>} : vector<8x76xbf16>, vector<76x384xbf16>, vector<8x384xf32> -> vector<8x384xf32>
    %c0_26 = arith.constant 0 : index
    %c0_27 = arith.constant 0 : index
    %40 = vector.load %arg5[%c0_26, %c0_27] : memref<8x1xf32, #tpu.memory_space<vmem>>, vector<8x1xf32>
    %41 = vector.broadcast %40 : vector<8x1xf32> to vector<8x384xf32>
    %42 = arith.addf %39, %41 : vector<8x384xf32>
    %cst_28 = arith.constant 0.000000e+00 : f32
    %43 = vector.broadcast %cst_28 : f32 to vector<8x384xf32>
    %44 = arith.maximumf %42, %43 : vector<8x384xf32>
    %c0_29 = arith.constant 0 : index
    %c0_30 = arith.constant 0 : index
    %c0_31 = arith.constant 0 : index
    %45 = vector.load %arg7[%c0_29, %c0_30, %c0_31] : memref<1x8x384xf32, #tpu.memory_space<vmem>>, vector<1x8x384xf32>
    %46 = vector.shape_cast %45 : vector<1x8x384xf32> to vector<8x384xf32>
    %47 = vector.shape_cast %44 : vector<8x384xf32> to vector<1x8x384xf32>
    tpu.vector_store %arg7[%c0_29, %c0_30, %c0_31], %47 {strides = array<i32>} : memref<1x8x384xf32, #tpu.memory_space<vmem>>, vector<1x8x384xf32>,
    return
  }
  func.func @transform_0(%arg0: i32) -> (i32, i32, i32) {
    %c0_i32 = arith.constant 0 : i32
    %c0_i32_0 = arith.constant 0 : i32
    %c0_i32_1 = arith.constant 0 : i32
    return %arg0, %c0_i32, %c0_i32_0 : i32, i32, i32
  }
  func.func @transform_1(%arg0: i32) -> (i32, i32) {
    %c0_i32 = arith.constant 0 : i32
    %c0_i32_0 = arith.constant 0 : i32
    %c0_i32_1 = arith.constant 0 : i32
    return %c0_i32, %c0_i32_0 : i32, i32
  }
  func.func @transform_2(%arg0: i32) -> (i32, i32) {
    %c0_i32 = arith.constant 0 : i32
    %c0_i32_0 = arith.constant 0 : i32
    %c0_i32_1 = arith.constant 0 : i32
    return %c0_i32, %c0_i32_0 : i32, i32
  }
  func.func @transform_3(%arg0: i32) -> (i32, i32) {
    %c0_i32 = arith.constant 0 : i32
    %c0_i32_0 = arith.constant 0 : i32
    %c0_i32_1 = arith.constant 0 : i32
    return %c0_i32, %c0_i32_0 : i32, i32
  }
  func.func @transform_4(%arg0: i32) -> (i32, i32) {
    %c0_i32 = arith.constant 0 : i32
    %c0_i32_0 = arith.constant 0 : i32
    %c0_i32_1 = arith.constant 0 : i32
    return %c0_i32, %c0_i32_0 : i32, i32
  }
  func.func @transform_5(%arg0: i32) -> (i32, i32) {
    %c0_i32 = arith.constant 0 : i32
    %c0_i32_0 = arith.constant 0 : i32
    %c0_i32_1 = arith.constant 0 : i32
    return %c0_i32, %c0_i32_0 : i32, i32
  }
  func.func @transform_6(%arg0: i32) -> (i32, i32, i32) {
    %c0_i32 = arith.constant 0 : i32
    %c0_i32_0 = arith.constant 0 : i32
    %c0_i32_1 = arith.constant 0 : i32
    return %arg0, %c0_i32, %c0_i32_0 : i32, i32, i32
  }
}

</mosaic_0001>

<llo_original>
// kernel: forward.1
$region0: #{forward.1}
  #allocation0 [shape = 'u32[]', space=smem, size = 0x4, offset = 0x4, fixed_abs, tag = 'smem constant byte address 0x4 - core index']
  #allocation1 [shape = 'u32[144,128]{1,0:T(1,128)}', space=vmem, size = 0x12000, scoped, tag = 'internal scratch']
  #allocation2 [shape = 'f32[76,384]{1,0:T(8,128)}', space=vmem, size = 0x1e000, scoped, tag = 'scratch operand']
  %s0 = inlined_call_operand.vmem [shape: bf16[2,36,384], index: 0, kind: input, shape index: {}]
  %s1 = inlined_call_operand.vmem [shape: bf16[8,36], index: 1, kind: input, shape index: {}]
  %s2 = inlined_call_operand.vmem [shape: f32[8,1], index: 2, kind: input, shape index: {}]
  %s3 = inlined_call_operand.vmem [shape: bf16[8,76], index: 3, kind: input, shape index: {}]
  %s4 = inlined_call_operand.vmem [shape: f32[8,1], index: 4, kind: input, shape index: {}]
  %s5 = inlined_call_operand.vmem [shape: f32[1,384], index: 5, kind: input, shape index: {}]
  %s6 = inlined_call_operand.vmem [shape: f32[2,8,384], index: 6, kind: output, shape index: {}]
  %s7 = sld [smem:[#allocation0]]
  $region61: #{forward.1} parent=0
    _
  %s9 = ssub.s32 1, %s7
  %s10 = scalar_select 0, %s9, %s7
  loop: start=0, step=1, limit=4
  $region2: #{forward.1} parent=0 // loop_pre_header
    _
  $region3: #{forward.1} parent=0 // loop_header
    %s12 = sphi 0, %s16
    %p13 = scmp.ge.s32.totalorder %s12, 4
    %s22 = sphi 0, %s24
    %s25 = sphi 0, %s22
    %s26 = sphi 0, %s25
    %s42 = sphi 0, %s26
    %s46 = sphi 0, %s46
    %s48 = sphi 0, %s46
    %s49 = sphi 0, %s48
    %s63 = sphi 0, %s49
    %s67 = sphi 0, %s67
    %s69 = sphi 0, %s67
    %s70 = sphi 0, %s69
    %s84 = sphi 0, %s70
    %s88 = sphi 0, %s88
    %s90 = sphi 0, %s88
    %s91 = sphi 0, %s90
    %s105 = sphi 0, %s91
    %s109 = sphi 0, %s109
    %s111 = sphi 0, %s109
    %s112 = sphi 0, %s111
    %s126 = sphi 0, %s112
    %s130 = sphi 0, %s130
    %s132 = sphi 0, %s130
    %s133 = sphi 0, %s132
    %s147 = sphi 0, %s133
    %s153 = sphi 0, %s155
    %s156 = sphi 0, %s153
    %s157 = sphi 0, %s156
    %s173 = sphi 0, %s157
  $region4: #{forward.1} parent=0 // loop_header_branch
    %15 = sbr.rel (%p13) target = $region8
  $region5: #{forward.1} parent=0 // loop_body
    %s17 = ssub.s32 %s12, 1
    %s18 = ssub.s32 %s12, 2
    %s19 = sadd.s32 %s12, 1
    %s20 = ssub.s32 %s12, %s19
    %p21 = scmp.eq.s32.totalorder %s20, 0
    %s23 = sadd.s32 %s22, 1
    %s24 = scalar_select %p21, %s22, %s23
    %p27 = pneg %p21
    %p28 = scmp.eq.s32.totalorder %s12, 1
    %p29 = por %p27, %p28
    %p30 = scmp.ne.s32.totalorder %s22, %s25
    %p31 = scmp.eq.s32.totalorder %s12, 0
    %p32 = por %p30, %p31
    %p33 = scmp.ne.s32.totalorder %s22, %s25
    %p34 = scmp.eq.s32.totalorder %s17, 1
    %p35 = por %p33, %p34
    %p36 = scmp.ne.s32.totalorder %s25, %s26
    %p37 = scmp.eq.s32.totalorder %s17, 0
    %p38 = por %p36, %p37
    %p39 = scmp.ne.s32.totalorder %s25, %s26
    %p40 = scmp.eq.s32.totalorder %s18, 1
    %p41 = por %p39, %p40
    %p43 = scmp.ne.s32.totalorder %s26, %s42
    %p44 = scmp.eq.s32.totalorder %s18, 0
    %p45 = por %p43, %p44
    %s47 = sadd.s32 %s46, 1
    %p50 = scmp.eq.s32.totalorder %s12, 1
    %p51 = scmp.ne.s32.totalorder %s46, %s48
    %p52 = scmp.eq.s32.totalorder %s12, 0
    %p53 = por %p51, %p52
    %p54 = scmp.ne.s32.totalorder %s46, %s48
    %p55 = scmp.eq.s32.totalorder %s17, 1
    %p56 = por %p54, %p55
    %p57 = scmp.ne.s32.totalorder %s48, %s49
    %p58 = scmp.eq.s32.totalorder %s17, 0
    %p59 = por %p57, %p58
    %p60 = scmp.ne.s32.totalorder %s48, %s49
    %p61 = scmp.eq.s32.totalorder %s18, 1
    %p62 = por %p60, %p61
    %p64 = scmp.ne.s32.totalorder %s49, %s63
    %p65 = scmp.eq.s32.totalorder %s18, 0
    %p66 = por %p64, %p65
    %s68 = sadd.s32 %s67, 1
    %p71 = scmp.eq.s32.totalorder %s12, 1
    %p72 = scmp.ne.s32.totalorder %s67, %s69
    %p73 = scmp.eq.s32.totalorder %s12, 0
    %p74 = por %p72, %p73
    %p75 = scmp.ne.s32.totalorder %s67, %s69
    %p76 = scmp.eq.s32.totalorder %s17, 1
    %p77 = por %p75, %p76
    %p78 = scmp.ne.s32.totalorder %s69, %s70
    %p79 = scmp.eq.s32.totalorder %s17, 0
    %p80 = por %p78, %p79
    %p81 = scmp.ne.s32.totalorder %s69, %s70
    %p82 = scmp.eq.s32.totalorder %s18, 1
    %p83 = por %p81, %p82
    %p85 = scmp.ne.s32.totalorder %s70, %s84
    %p86 = scmp.eq.s32.totalorder %s18, 0
    %p87 = por %p85, %p86
    %s89 = sadd.s32 %s88, 1
    %p92 = scmp.eq.s32.totalorder %s12, 1
    %p93 = scmp.ne.s32.totalorder %s88, %s90
    %p94 = scmp.eq.s32.totalorder %s12, 0
    %p95 = por %p93, %p94
    %p96 = scmp.ne.s32.totalorder %s88, %s90
    %p97 = scmp.eq.s32.totalorder %s17, 1
    %p98 = por %p96, %p97
    %p99 = scmp.ne.s32.totalorder %s90, %s91
    %p100 = scmp.eq.s32.totalorder %s17, 0
    %p101 = por %p99, %p100
    %p102 = scmp.ne.s32.totalorder %s90, %s91
    %p103 = scmp.eq.s32.totalorder %s18, 1
    %p104 = por %p102, %p103
    %p106 = scmp.ne.s32.totalorder %s91, %s105
    %p107 = scmp.eq.s32.totalorder %s18, 0
    %p108 = por %p106, %p107
    %s110 = sadd.s32 %s109, 1
    %p113 = scmp.eq.s32.totalorder %s12, 1
    %p114 = scmp.ne.s32.totalorder %s109, %s111
    %p115 = scmp.eq.s32.totalorder %s12, 0
    %p116 = por %p114, %p115
    %p117 = scmp.ne.s32.totalorder %s109, %s111
    %p118 = scmp.eq.s32.totalorder %s17, 1
    %p119 = por %p117, %p118
    %p120 = scmp.ne.s32.totalorder %s111, %s112
    %p121 = scmp.eq.s32.totalorder %s17, 0
    %p122 = por %p120, %p121
    %p123 = scmp.ne.s32.totalorder %s111, %s112
    %p124 = scmp.eq.s32.totalorder %s18, 1
    %p125 = por %p123, %p124
    %p127 = scmp.ne.s32.totalorder %s112, %s126
    %p128 = scmp.eq.s32.totalorder %s18, 0
    %p129 = por %p127, %p128
    %s131 = sadd.s32 %s130, 1
    %p134 = scmp.eq.s32.totalorder %s12, 1
    %p135 = scmp.ne.s32.totalorder %s130, %s132
    %p136 = scmp.eq.s32.totalorder %s12, 0
    %p137 = por %p135, %p136
    %p138 = scmp.ne.s32.totalorder %s130, %s132
    %p139 = scmp.eq.s32.totalorder %s17, 1
    %p140 = por %p138, %p139
    %p141 = scmp.ne.s32.totalorder %s132, %s133
    %p142 = scmp.eq.s32.totalorder %s17, 0
    %p143 = por %p141, %p142
    %p144 = scmp.ne.s32.totalorder %s132, %s133
    %p145 = scmp.eq.s32.totalorder %s18, 1
    %p146 = por %p144, %p145
    %p148 = scmp.ne.s32.totalorder %s133, %s147
    %p149 = scmp.eq.s32.totalorder %s18, 0
    %p150 = por %p148, %p149
    %s151 = ssub.s32 %s12, %s19
    %p152 = scmp.eq.s32.totalorder %s151, 0
    %s154 = sadd.s32 %s153, 1
    %s155 = scalar_select %p152, %s153, %s154
    %p158 = pneg %p152
    %p159 = scmp.eq.s32.totalorder %s12, 1
    %p160 = por %p158, %p159
    %p161 = scmp.ne.s32.totalorder %s153, %s156
    %p162 = scmp.eq.s32.totalorder %s12, 0
    %p163 = por %p161, %p162
    %p164 = scmp.ne.s32.totalorder %s153, %s156
    %p165 = scmp.eq.s32.totalorder %s17, 1
    %p166 = por %p164, %p165
    %p167 = scmp.ne.s32.totalorder %s156, %s157
    %p168 = scmp.eq.s32.totalorder %s17, 0
    %p169 = por %p167, %p168
    %p170 = scmp.ne.s32.totalorder %s156, %s157
    %p171 = scmp.eq.s32.totalorder %s18, 1
    %p172 = por %p170, %p171
    %p174 = scmp.ne.s32.totalorder %s157, %s173
    %p175 = scmp.eq.s32.totalorder %s18, 0
    %p176 = por %p174, %p175
    %p177 = scmp.le.s32.totalorder 1, %s12
    %p178 = scmp.lt.s32.totalorder %s12, 3
    %p179 = pnand %p177, %p178
    %p180 = pneg %p179
    // Predicated region
    $region9: #{forward.1} parent=5 // pred_check
      _
    $region10: #{forward.1} parent=5 // pred_check_branch
      %182 = sbr.rel (%p179) target = $region12
    $region11: #{forward.1} parent=5 // pred_region
      %s183 = ssub.s32 %s12, 1
      // Predicated region
      $region13: #{forward.1} parent=11 // pred_check
        %p184 = pneg %p59
      $region14: #{forward.1} parent=11 // pred_check_branch
        %186 = sbr.rel (%p184) target = $region16
      $region15: #{forward.1} parent=11 // pred_region
        _
      $region16: #{forward.1} parent=11 // pred_fallthru
        _
      // Predicated region
      $region17: #{forward.1} parent=11 // pred_check
        %p187 = pneg %p80
      $region18: #{forward.1} parent=11 // pred_check_branch
        %189 = sbr.rel (%p187) target = $region20
      $region19: #{forward.1} parent=11 // pred_region
        _
      $region20: #{forward.1} parent=11 // pred_fallthru
        _
      // Predicated region
      $region21: #{forward.1} parent=11 // pred_check
        %p190 = pneg %p101
      $region22: #{forward.1} parent=11 // pred_check_branch
        %192 = sbr.rel (%p190) target = $region24
      $region23: #{forward.1} parent=11 // pred_region
        _
      $region24: #{forward.1} parent=11 // pred_fallthru
        _
      // Predicated region
      $region25: #{forward.1} parent=11 // pred_check
        %p193 = pneg %p122
      $region26: #{forward.1} parent=11 // pred_check_branch
        %195 = sbr.rel (%p193) target = $region28
      $region27: #{forward.1} parent=11 // pred_region
        _
      $region28: #{forward.1} parent=11 // pred_fallthru
        _
      // Predicated region
      $region29: #{forward.1} parent=11 // pred_check
        %p196 = pneg %p143
      $region30: #{forward.1} parent=11 // pred_check_branch
        %198 = sbr.rel (%p196) target = $region32
      $region31: #{forward.1} parent=11 // pred_region
        _
      $region32: #{forward.1} parent=11 // pred_fallthru
        _
    $region12: #{forward.1} parent=5 // pred_fallthru
      _
    %p199 = scmp.lt.s32.totalorder %s12, 2
    // Predicated region
    $region33: #{forward.1} parent=5 // pred_check
      %p200 = pneg %p199
    $region34: #{forward.1} parent=5 // pred_check_branch
      %202 = sbr.rel (%p200) target = $region36
    $region35: #{forward.1} parent=5 // pred_region
      // Predicated region
      $region37: #{forward.1} parent=35 // pred_check
        %p203 = pneg %p32
      $region38: #{forward.1} parent=35 // pred_check_branch
        %205 = sbr.rel (%p203) target = $region40
      $region39: #{forward.1} parent=35 // pred_region
        %p206 = scmp.lt.s32.totalorder %s12, 1
        %s207 = scalar_select %p206, %s12, 1
        %s208 = smul.addr %s207, 15
        %s209 = smul.addr %s208, 4
        %s210 = scalar_lea.vmem %s0, %s209
      $region40: #{forward.1} parent=35 // pred_fallthru
        _
    $region36: #{forward.1} parent=5 // pred_fallthru
      _
    %p211 = scmp.le.s32.totalorder 1, %s12
    %p212 = scmp.lt.s32.totalorder %s12, 3
    %p213 = pnand %p211, %p212
    %p214 = pneg %p213
    // Predicated region
    $region41: #{forward.1} parent=5 // pred_check
      _
    $region42: #{forward.1} parent=5 // pred_check_branch
      %216 = sbr.rel (%p213) target = $region44
    $region43: #{forward.1} parent=5 // pred_region
      %s217 = ssub.s32 %s12, 1
      %p218 = scmp.lt.s32.totalorder %s17, 1
      %s219 = scalar_select %p218, %s17, 1
      %s220 = smul.addr %s219, 15
      %s221 = smul.addr %s220, 4
      %s222 = scalar_lea.vmem %s0, %s221
      %p223 = pneg %p38
      %p224 = pneg %p35
      %p225 = pneg %p59
      %p226 = pneg %p56
      %p227 = pneg %p80
      %p228 = pneg %p77
      %p229 = pneg %p101
      %p230 = pneg %p98
      %p231 = pneg %p122
      %p232 = pneg %p119
      %p233 = pneg %p143
      %p234 = pneg %p140
      %p235 = pneg %p169
      %p236 = pneg %p166
      %p237 = scmp.lt.s32.totalorder %s17, 1
      %s238 = scalar_select %p237, %s17, 1
      %s239 = smul.addr %s238, 3
      %s240 = smul.addr %s239, 8
      %s241 = scalar_lea.vmem %s6, %s240
      %p242 = scmp.lt.s32.totalorder %s17, 1
      %s243 = scalar_select %p242, %s17, 1
      %s244 = smul.addr %s243, 15
      %s245 = smul.addr %s244, 4
      %s246 = scalar_lea.vmem %s0, %s245
      %p247 = scmp.lt.s32.totalorder %s17, 1
      %s248 = scalar_select %p247, %s17, 1
      %s249 = smul.addr %s248, 3
      %s250 = smul.addr %s249, 8
      %s251 = scalar_lea.vmem %s6, %s250
      %p253 = scmp.eq.s32.totalorder %s17, 0
      // Predicated region
      $region45: #{forward.1} parent=43 // pred_check
        %p254 = pneg %p253
      $region46: #{forward.1} parent=43 // pred_check_branch
        %256 = sbr.rel (%p254) target = $region48
      $region47: #{forward.1} parent=43 // pred_region
        %257 = vst [vmem:[#allocation2] sm:$0xff] 0.0
        %258 = vst [vmem:[#allocation2 + $0x8] sm:$0xff] 0.0
        %259 = vst [vmem:[#allocation2 + $0x10] sm:$0xff] 0.0
        %260 = vst [vmem:[#allocation2 + $0x18] sm:$0xff] 0.0
        %261 = vst [vmem:[#allocation2 + $0x20] sm:$0xff] 0.0
        %262 = vst [vmem:[#allocation2 + $0x28] sm:$0xff] 0.0
        %263 = vst [vmem:[#allocation2 + $0x30] sm:$0xff] 0.0
        %264 = vst [vmem:[#allocation2 + $0x38] sm:$0xff] 0.0
        %265 = vst [vmem:[#allocation2 + $0x40] sm:$0xff] 0.0
        %266 = vst [vmem:[#allocation2 + $0x48] sm:$0xff] 0.0
        %267 = vst [vmem:[#allocation2 + $0x50] sm:$0xff] 0.0
        %268 = vst [vmem:[#allocation2 + $0x58] sm:$0xff] 0.0
        %269 = vst [vmem:[#allocation2 + $0x60] sm:$0xff] 0.0
        %270 = vst [vmem:[#allocation2 + $0x68] sm:$0xff] 0.0
        %271 = vst [vmem:[#allocation2 + $0x70] sm:$0xff] 0.0
        %272 = vst [vmem:[#allocation2 + $0x78] sm:$0xff] 0.0
        %273 = vst [vmem:[#allocation2 + $0x80] sm:$0xff] 0.0
        %274 = vst [vmem:[#allocation2 + $0x88] sm:$0xff] 0.0
        %275 = vst [vmem:[#allocation2 + $0x90] sm:$0xff] 0.0
        %276 = vst [vmem:[#allocation2 + $0x98] sm:$0xff] 0.0
        %277 = vst [vmem:[#allocation2 + $0xa0] sm:$0xff] 0.0
        %278 = vst [vmem:[#allocation2 + $0xa8] sm:$0xff] 0.0
        %279 = vst [vmem:[#allocation2 + $0xb0] sm:$0xff] 0.0
        %280 = vst [vmem:[#allocation2 + $0xb8] sm:$0xff] 0.0
        %281 = vst [vmem:[#allocation2 + $0xc0] sm:$0xff] 0.0
        %282 = vst [vmem:[#allocation2 + $0xc8] sm:$0xff] 0.0
        %283 = vst [vmem:[#allocation2 + $0xd0] sm:$0xff] 0.0
        %284 = vst [vmem:[#allocation2 + $0xd8] sm:$0xf] 0.0
        %285 = vst [vmem:[#allocation2 + $0xe0] sm:$0xf] 0.0
        %286 = vst [vmem:[#allocation2 + $0xe8] sm:$0xf] 0.0
      $region48: #{forward.1} parent=43 // pred_fallthru
        _
      %v287 = vld [vmem:[%s246] sm:$0xff]
      %v288 = vld [vmem:[%s246 + $0x8] sm:$0xf]
      %v289 = vld [vmem:[%s246 + $0xc] sm:$0xff]
      %v290 = vld [vmem:[%s246 + $0x14] sm:$0xf]
      %v291 = vld [vmem:[%s246 + $0x18] sm:$0xff]
      %v292 = vld [vmem:[%s246 + $0x20] sm:$0xf]
      %v293 = vld [vmem:[%s246 + $0x24] sm:$0xff]
      %v294 = vld [vmem:[%s246 + $0x2c] sm:$0xf]
      %v295 = vld [vmem:[%s246 + $0x30] sm:$0x33]
      %v296 = vld [vmem:[%s246 + $0x38] sm:$0x3]
      %v297 = vld [vmem:[%s1] sm:$0xf]
      %v298 = vld [vmem:[%s2] sm:$0xff]
      %300 = vset.pattern.permute.xlu0 0
      %301 = vperm.xlu0 %300, %v298
      %v302 = vpop.permute.xlu0 %301
      %v314 = vunpack.c.l.b16 %v287
      %v315 = vunpack.c.h.b16 %v287
      %v316 = vunpack.c.l.b16 %v288
      %v317 = vunpack.c.l.b16 %v289
      %v318 = vunpack.c.h.b16 %v289
      %v319 = vunpack.c.l.b16 %v290
      %v320 = vunpack.c.l.b16 %v291
      %v321 = vunpack.c.h.b16 %v291
      %v322 = vunpack.c.l.b16 %v292
      %v323 = vunpack.c.l.b16 %v293
      %v324 = vunpack.c.h.b16 %v293
      %v325 = vunpack.c.l.b16 %v294
      %v326 = vunpack.c.l.b16 %v295
      %v327 = vunpack.c.h.b16 %v295
      %v328 = vunpack.c.l.b16 %v296
      %v329 = vpack.c.b16 %v317, %v314
      %v330 = vpack.c.b16 %v318, %v315
      %v331 = vpack.c.b16 %v319, %v316
      %v332 = vpack.c.b16 %v323, %v320
      %v333 = vpack.c.b16 %v324, %v321
      %v334 = vpack.c.b16 %v325, %v322
      %v335 = vpack.c.b16 %v326, %v326
      %v336 = vpack.c.b16 %v327, %v327
      %v337 = vpack.c.b16 %v328, %v328
      %vm344 = vcmask 293888
      %v346 = vsel %vm344, %v297, 0
      %vm348 = vcmask 1041408
      %v350 = vsel %vm348, %v335, 0
      %v353 = vsel %vm348, %v336, 0
      %v356 = vsel %vm348, %v337, 0
      %358 = vmatprep.subr.bf16.mxu0 %v330
      %359 = vmatpush1.bf16.msra.mxu0 %v329
      %360 = vmatprep.subr.bf16.mxu0 %v333
      %361 = vmatpush1.bf16.msra.mxu0 %v332
      %362 = vmatprep.subr.bf16.mxu0 %v353
      %363 = vmatpush1.bf16.msra.mxu0 %v350
      %364 = vmatprep.subr.bf16.mxu0 0
      %365 = vmatpush1.bf16.msra.mxu0 0
      %366 = vmatprep.subr.bf16.mxu0 0
      %367 = vmatpush1.bf16.msra.mxu0 0
      %368 = vmatprep.subr.bf16.mxu0 0
      %369 = vmatpush1.bf16.msra.mxu0 0
      %370 = vmatprep.subr.bf16.mxu0 0
      %371 = vmatpush1.bf16.msra.mxu0 0
      %372 = vmatprep.subr.bf16.mxu0 0
      %373 = vmatpush1.bf16.msra.mxu0 0
      %374 = vmatprep.subr.bf16.mxu0 0
      %375 = vmatpush1.bf16.msra.mxu0 0
      %376 = vmatprep.subr.bf16.mxu0 0
      %377 = vmatpush1.bf16.msra.mxu0 0
      %378 = vmatprep.subr.bf16.mxu0 0
      %379 = vmatpush1.bf16.msra.mxu0 0
      %380 = vmatprep.subr.bf16.mxu0 0
      %381 = vmatpush1.bf16.msra.mxu0 0
      %382 = vmatprep.subr.bf16.mxu0 0
      %383 = vmatpush1.bf16.msra.mxu0 0
      %384 = vmatprep.subr.bf16.mxu0 0
      %385 = vmatpush1.bf16.msra.mxu0 0
      %386 = vmatprep.subr.bf16.mxu0 0
      %387 = vmatpush1.bf16.msra.mxu0 0
      %388 = vmatprep.subr.bf16.mxu0 0
      %389 = vmatpush1.bf16.msra.mxu0 0
      %390 = vmatprep.mubr.bf16.mxu0 0
      %391 = vmatmul.mubr.bf16.gmra.mrb[0].mxu0 %v346
      %v392 = vpop.f32.mrb[0].mxu0
      %v393 = vadd.f32 %v302, %v392
      %v394 = vpop.f32.mrb[0].mxu0
      %v395 = vadd.f32 %v302, %v394
      %v396 = vpop.f32.mrb[0].mxu0
      %v397 = vpop.f32.mrb[0].mxu0
      %398 = vdwg.mxu0
      %399 = vmatprep.subr.bf16.mxu0 0
      %400 = vmatpush1.bf16.msra.mxu0 %v331
      %401 = vmatprep.subr.bf16.mxu0 0
      %402 = vmatpush1.bf16.msra.mxu0 %v334
      %403 = vmatprep.subr.bf16.mxu0 0
      %404 = vmatpush1.bf16.msra.mxu0 %v356
      %405 = vmatprep.subr.bf16.mxu0 0
      %406 = vmatpush1.bf16.msra.mxu0 0
      %407 = vmatprep.subr.bf16.mxu0 0
      %408 = vmatpush1.bf16.msra.mxu0 0
      %409 = vmatprep.subr.bf16.mxu0 0
      %410 = vmatpush1.bf16.msra.mxu0 0
      %411 = vmatprep.subr.bf16.mxu0 0
      %412 = vmatpush1.bf16.msra.mxu0 0
      %413 = vmatprep.subr.bf16.mxu0 0
      %414 = vmatpush1.bf16.msra.mxu0 0
      %415 = vmatprep.subr.bf16.mxu0 0
      %416 = vmatpush1.bf16.msra.mxu0 0
      %417 = vmatprep.subr.bf16.mxu0 0
      %418 = vmatpush1.bf16.msra.mxu0 0
      %419 = vmatprep.subr.bf16.mxu0 0
      %420 = vmatpush1.bf16.msra.mxu0 0
      %421 = vmatprep.subr.bf16.mxu0 0
      %422 = vmatpush1.bf16.msra.mxu0 0
      %423 = vmatprep.subr.bf16.mxu0 0
      %424 = vmatpush1.bf16.msra.mxu0 0
      %425 = vmatprep.subr.bf16.mxu0 0
      %426 = vmatpush1.bf16.msra.mxu0 0
      %427 = vmatprep.subr.bf16.mxu0 0
      %428 = vmatpush1.bf16.msra.mxu0 0
      %429 = vmatprep.subr.bf16.mxu0 0
      %430 = vmatpush1.bf16.msra.mxu0 0
      %431 = vmatprep.mubr.bf16.mxu0 0
      %432 = vmatmul.mubr.bf16.gmra.mrb[0].mxu0 %v346
      %v433 = vpop.f32.mrb[0].mxu0
      %v434 = vadd.f32 %v302, %v433
      %v435 = vpop.f32.mrb[0].mxu0
      %v436 = vpop.f32.mrb[0].mxu0
      %v437 = vpop.f32.mrb[0].mxu0
      %438 = vdwg.mxu0
      %v439 = vmax.f32 %v393, 0.0
      %v440 = vmax.f32 %v395, 0.0
      %v441 = vmax.f32 %v434, 0.0
      %v442 = vld [vmem:[%s5] sm:$0x7]
      %v444 = vlaneseq
      %v445 = vshrl.u32 %v444, 7
      %v446 = vsub.s32 0, %v445
      %v447 = vrot.slane %v442, %v446
      %v448 = vlaneseq
      %v449 = vshrl.u32 %v448, 7
      %v450 = vsub.s32 1, %v449
      %v451 = vrot.slane %v442, %v450
      %v452 = vlaneseq
      %v453 = vshrl.u32 %v452, 7
      %v454 = vsub.s32 2, %v453
      %v455 = vrot.slane %v442, %v454
      %v459 = vmul.f32 %v439, %v447
      %v460 = vmul.f32 %v440, %v451
      %v461 = vmul.f32 %v441, %v455
      %462 = vst [vmem:[#allocation2] sm:$0xff] %v459
      %463 = vst [vmem:[#allocation2 + $0x8] sm:$0xff] %v460
      %vm464 = vcmask 261120
      %465 = vst.msk [vmem:[#allocation2 + $0x10] sm:$0xff] %vm464, %v461
      %469 = vrot.lane.b32.xlu0 %v459, 127
      %v470 = vpop.permute.xlu0 %469
      %471 = vrot.lane.b32.xlu0 %v460, 127
      %v472 = vpop.permute.xlu0 %471
      %473 = vrot.lane.b32.xlu0 %v461, 127
      %v474 = vpop.permute.xlu0 %473
      %vm475 = vcmask 1039360
      %v476 = vsel %vm475, %v470, %v472
      %v477 = vsel %vm475, %v472, %v474
      %481 = vst [vmem:[#allocation2 + $0x18] sm:$0xff] %v476
      %482 = vst [vmem:[#allocation2 + $0x20] sm:$0xff] %v477
      %483 = vst.msk [vmem:[#allocation2 + $0x28] sm:$0xff] %vm464, %v474
      %484 = vrot.lane.b32.xlu0 %v459, 126
      %v485 = vpop.permute.xlu0 %484
      %486 = vrot.lane.b32.xlu0 %v460, 126
      %v487 = vpop.permute.xlu0 %486
      %488 = vrot.lane.b32.xlu0 %v461, 126
      %v489 = vpop.permute.xlu0 %488
      %vm490 = vcmask 1031168
      %v491 = vsel %vm490, %v485, %v487
      %v492 = vsel %vm490, %v487, %v489
      %496 = vst [vmem:[#allocation2 + $0x30] sm:$0xff] %v491
      %497 = vst [vmem:[#allocation2 + $0x38] sm:$0xff] %v492
      %498 = vst.msk [vmem:[#allocation2 + $0x40] sm:$0xff] %vm464, %v489
      %499 = vrot.lane.b32.xlu0 %v459, 110
      %v500 = vpop.permute.xlu0 %499
      %501 = vrot.lane.b32.xlu0 %v460, 110
      %v502 = vpop.permute.xlu0 %501
      %503 = vrot.lane.b32.xlu0 %v461, 110
      %v504 = vpop.permute.xlu0 %503
      %vm505 = vcmask 900096
      %v506 = vsel %vm505, %v500, %v502
      %v507 = vsel %vm505, %v502, %v504
      %511 = vst [vmem:[#allocation2 + $0x48] sm:$0xff] %v506
      %512 = vst [vmem:[#allocation2 + $0x50] sm:$0xff] %v507
      %513 = vst.msk [vmem:[#allocation2 + $0x58] sm:$0xff] %vm464, %v504
      %514 = vrot.lane.b32.xlu0 %v459, 109
      %v515 = vpop.permute.xlu0 %514
      %516 = vrot.lane.b32.xlu0 %v460, 109
      %v517 = vpop.permute.xlu0 %516
      %518 = vrot.lane.b32.xlu0 %v461, 109
      %v519 = vpop.permute.xlu0 %518
      %vm520 = vcmask 891904
      %v521 = vsel %vm520, %v515, %v517
      %v522 = vsel %vm520, %v517, %v519
      %526 = vst [vmem:[#allocation2 + $0x60] sm:$0xff] %v521
      %527 = vst [vmem:[#allocation2 + $0x68] sm:$0xff] %v522
      %528 = vst.msk [vmem:[#allocation2 + $0x70] sm:$0xff] %vm464, %v519
      %529 = vrot.lane.b32.xlu0 %v459, 108
      %v530 = vpop.permute.xlu0 %529
      %531 = vrot.lane.b32.xlu0 %v460, 108
      %v532 = vpop.permute.xlu0 %531
      %533 = vrot.lane.b32.xlu0 %v461, 108
      %v534 = vpop.permute.xlu0 %533
      %vm535 = vcmask 883712
      %v536 = vsel %vm535, %v530, %v532
      %v537 = vsel %vm535, %v532, %v534
      %541 = vst [vmem:[#allocation2 + $0x78] sm:$0xff] %v536
      %542 = vst [vmem:[#allocation2 + $0x80] sm:$0xff] %v537
      %543 = vst.msk [vmem:[#allocation2 + $0x88] sm:$0xff] %vm464, %v534
      %544 = vrot.lane.b32.xlu0 %v459, 92
      %v545 = vpop.permute.xlu0 %544
      %546 = vrot.lane.b32.xlu0 %v460, 92
      %v547 = vpop.permute.xlu0 %546
      %548 = vrot.lane.b32.xlu0 %v461, 92
      %v549 = vpop.permute.xlu0 %548
      %vm550 = vcmask 752640
      %v551 = vsel %vm550, %v545, %v547
      %v552 = vsel %vm550, %v547, %v549
      %556 = vst [vmem:[#allocation2 + $0x90] sm:$0xff] %v551
      %557 = vst [vmem:[#allocation2 + $0x98] sm:$0xff] %v552
      %558 = vst.msk [vmem:[#allocation2 + $0xa0] sm:$0xff] %vm464, %v549
      %559 = vrot.lane.b32.xlu0 %v459, 91
      %v560 = vpop.permute.xlu0 %559
      %561 = vrot.lane.b32.xlu0 %v460, 91
      %v562 = vpop.permute.xlu0 %561
      %563 = vrot.lane.b32.xlu0 %v461, 91
      %v564 = vpop.permute.xlu0 %563
      %vm565 = vcmask 744448
      %v566 = vsel %vm565, %v560, %v562
      %v567 = vsel %vm565, %v562, %v564
      %571 = vst [vmem:[#allocation2 + $0xa8] sm:$0xff] %v566
      %572 = vst [vmem:[#allocation2 + $0xb0] sm:$0xff] %v567
      %573 = vst.msk [vmem:[#allocation2 + $0xb8] sm:$0xff] %vm464, %v564
      %574 = vrot.lane.b32.xlu0 %v459, 90
      %v575 = vpop.permute.xlu0 %574
      %576 = vrot.lane.b32.xlu0 %v460, 90
      %v577 = vpop.permute.xlu0 %576
      %578 = vrot.lane.b32.xlu0 %v461, 90
      %v579 = vpop.permute.xlu0 %578
      %vm580 = vcmask 736256
      %v581 = vsel %vm580, %v575, %v577
      %v582 = vsel %vm580, %v577, %v579
      %586 = vst [vmem:[#allocation2 + $0xc0] sm:$0xff] %v581
      %587 = vst [vmem:[#allocation2 + $0xc8] sm:$0xff] %v582
      %588 = vst.msk [vmem:[#allocation2 + $0xd0] sm:$0xff] %vm464, %v579
      %v589 = vunpack.c.l.bf16 %v291
      %v590 = vunpack.c.h.bf16 %v291
      %v591 = vunpack.c.l.bf16 %v292
      %595 = vrot.lane.b32.xlu0 %v589, 109
      %v596 = vpop.permute.xlu0 %595
      %597 = vrot.lane.b32.xlu0 %v590, 109
      %v598 = vpop.permute.xlu0 %597
      %599 = vrot.lane.b32.xlu0 %v591, 109
      %v600 = vpop.permute.xlu0 %599
      %v601 = vsel %vm520, %v596, %v598
      %v602 = vsel %vm520, %v598, %v600
      %606 = vst [vmem:[#allocation2 + $0xd8] sm:$0xf] %v601
      %607 = vst [vmem:[#allocation2 + $0xe0] sm:$0xf] %v602
      %vm608 = vcmask 257024
      %609 = vst.msk [vmem:[#allocation2 + $0xe8] sm:$0xf] %vm608, %v600
      %v610 = vld [vmem:[%s3] sm:$0xf]
      %v611 = vld [vmem:[#allocation2] sm:$0xff]
      %v612 = vld [vmem:[#allocation2 + $0x8] sm:$0xff]
      %v613 = vld [vmem:[#allocation2 + $0x10] sm:$0xff]
      %v614 = vld [vmem:[#allocation2 + $0x18] sm:$0xff]
      %v615 = vld [vmem:[#allocation2 + $0x20] sm:$0xff]
      %v616 = vld [vmem:[#allocation2 + $0x28] sm:$0xff]
      %v617 = vld [vmem:[#allocation2 + $0x30] sm:$0xff]
      %v618 = vld [vmem:[#allocation2 + $0x38] sm:$0xff]
      %v619 = vld [vmem:[#allocation2 + $0x40] sm:$0xff]
      %v620 = vld [vmem:[#allocation2 + $0x48] sm:$0xff]
      %v621 = vld [vmem:[#allocation2 + $0x50] sm:$0xff]
      %v622 = vld [vmem:[#allocation2 + $0x58] sm:$0xff]
      %v623 = vld [vmem:[#allocation2 + $0x60] sm:$0xff]
      %v624 = vld [vmem:[#allocation2 + $0x68] sm:$0xff]
      %v625 = vld [vmem:[#allocation2 + $0x70] sm:$0xff]
      %v626 = vld [vmem:[#allocation2 + $0x78] sm:$0xff]
      %v627 = vld [vmem:[#allocation2 + $0x80] sm:$0xff]
      %v628 = vld [vmem:[#allocation2 + $0x88] sm:$0xff]
      %v629 = vld [vmem:[#allocation2 + $0x90] sm:$0xff]
      %v630 = vld [vmem:[#allocation2 + $0x98] sm:$0xff]
      %v631 = vld [vmem:[#allocation2 + $0xa0] sm:$0xff]
      %v632 = vld [vmem:[#allocation2 + $0xa8] sm:$0xff]
      %v633 = vld [vmem:[#allocation2 + $0xb0] sm:$0xff]
      %v634 = vld [vmem:[#allocation2 + $0xb8] sm:$0xff]
      %v635 = vld [vmem:[#allocation2 + $0xc0] sm:$0xff]
      %v636 = vld [vmem:[#allocation2 + $0xc8] sm:$0xff]
      %v637 = vld [vmem:[#allocation2 + $0xd0] sm:$0xff]
      %v638 = vld [vmem:[#allocation2 + $0xd8] sm:$0xf]
      %v639 = vld [vmem:[#allocation2 + $0xe0] sm:$0xf]
      %v640 = vld [vmem:[#allocation2 + $0xe8] sm:$0xf]
      %v641 = vpack.c.bf16 %v614, %v611
      %v642 = vpack.c.bf16 %v615, %v612
      %v643 = vpack.c.bf16 %v616, %v613
      %v644 = vpack.c.bf16 %v620, %v617
      %v645 = vpack.c.bf16 %v621, %v618
      %v646 = vpack.c.bf16 %v622, %v619
      %v647 = vpack.c.bf16 %v626, %v623
      %v648 = vpack.c.bf16 %v627, %v624
      %v649 = vpack.c.bf16 %v628, %v625
      %v650 = vpack.c.bf16 %v632, %v629
      %v651 = vpack.c.bf16 %v633, %v630
      %v652 = vpack.c.bf16 %v634, %v631
      %v653 = vpack.c.bf16 %v638, %v635
      %v654 = vpack.c.bf16 %v639, %v636
      %v655 = vpack.c.bf16 %v640, %v637
      %v656 = vld [vmem:[%s4] sm:$0xff]
      %658 = vset.pattern.permute.xlu0 0
      %659 = vperm.xlu0 %658, %v656
      %v660 = vpop.permute.xlu0 %659
      %vm662 = vcmask 621568
      %v664 = vsel %vm662, %v610, 0
      %vm666 = vcmask 1045504
      %v668 = vsel %vm666, %v653, 0
      %v671 = vsel %vm666, %v654, 0
      %v674 = vsel %vm666, %v655, 0
      %676 = vmatprep.subr.bf16.mxu0 %v642
      %677 = vmatpush1.bf16.msra.mxu0 %v641
      %678 = vmatprep.subr.bf16.mxu0 %v645
      %679 = vmatpush1.bf16.msra.mxu0 %v644
      %680 = vmatprep.subr.bf16.mxu0 %v648
      %681 = vmatpush1.bf16.msra.mxu0 %v647
      %682 = vmatprep.subr.bf16.mxu0 %v651
      %683 = vmatpush1.bf16.msra.mxu0 %v650
      %684 = vmatprep.subr.bf16.mxu0 %v671
      %685 = vmatpush1.bf16.msra.mxu0 %v668
      %686 = vmatprep.subr.bf16.mxu0 0
      %687 = vmatpush1.bf16.msra.mxu0 0
      %688 = vmatprep.subr.bf16.mxu0 0
      %689 = vmatpush1.bf16.msra.mxu0 0
      %690 = vmatprep.subr.bf16.mxu0 0
      %691 = vmatpush1.bf16.msra.mxu0 0
      %692 = vmatprep.subr.bf16.mxu0 0
      %693 = vmatpush1.bf16.msra.mxu0 0
      %694 = vmatprep.subr.bf16.mxu0 0
      %695 = vmatpush1.bf16.msra.mxu0 0
      %696 = vmatprep.subr.bf16.mxu0 0
      %697 = vmatpush1.bf16.msra.mxu0 0
      %698 = vmatprep.subr.bf16.mxu0 0
      %699 = vmatpush1.bf16.msra.mxu0 0
      %700 = vmatprep.subr.bf16.mxu0 0
      %701 = vmatpush1.bf16.msra.mxu0 0
      %702 = vmatprep.subr.bf16.mxu0 0
      %703 = vmatpush1.bf16.msra.mxu0 0
      %704 = vmatprep.subr.bf16.mxu0 0
      %705 = vmatpush1.bf16.msra.mxu0 0
      %706 = vmatprep.subr.bf16.mxu0 0
      %707 = vmatpush1.bf16.msra.mxu0 0
      %708 = vmatprep.mubr.bf16.mxu0 0
      %709 = vmatmul.mubr.bf16.gmra.mrb[0].mxu0 %v664
      %v710 = vpop.f32.mrb[0].mxu0
      %v711 = vadd.f32 %v660, %v710
      %v712 = vpop.f32.mrb[0].mxu0
      %v713 = vadd.f32 %v660, %v712
      %v714 = vpop.f32.mrb[0].mxu0
      %v715 = vpop.f32.mrb[0].mxu0
      %716 = vdwg.mxu0
      %717 = vmatprep.subr.bf16.mxu0 0
      %718 = vmatpush1.bf16.msra.mxu0 %v643
      %719 = vmatprep.subr.bf16.mxu0 0
      %720 = vmatpush1.bf16.msra.mxu0 %v646
      %721 = vmatprep.subr.bf16.mxu0 0
      %722 = vmatpush1.bf16.msra.mxu0 %v649
      %723 = vmatprep.subr.bf16.mxu0 0
      %724 = vmatpush1.bf16.msra.mxu0 %v652
      %725 = vmatprep.subr.bf16.mxu0 0
      %726 = vmatpush1.bf16.msra.mxu0 %v674
      %727 = vmatprep.subr.bf16.mxu0 0
      %728 = vmatpush1.bf16.msra.mxu0 0
      %729 = vmatprep.subr.bf16.mxu0 0
      %730 = vmatpush1.bf16.msra.mxu0 0
      %731 = vmatprep.subr.bf16.mxu0 0
      %732 = vmatpush1.bf16.msra.mxu0 0
      %733 = vmatprep.subr.bf16.mxu0 0
      %734 = vmatpush1.bf16.msra.mxu0 0
      %735 = vmatprep.subr.bf16.mxu0 0
      %736 = vmatpush1.bf16.msra.mxu0 0
      %737 = vmatprep.subr.bf16.mxu0 0
      %738 = vmatpush1.bf16.msra.mxu0 0
      %739 = vmatprep.subr.bf16.mxu0 0
      %740 = vmatpush1.bf16.msra.mxu0 0
      %741 = vmatprep.subr.bf16.mxu0 0
      %742 = vmatpush1.bf16.msra.mxu0 0
      %743 = vmatprep.subr.bf16.mxu0 0
      %744 = vmatpush1.bf16.msra.mxu0 0
      %745 = vmatprep.subr.bf16.mxu0 0
      %746 = vmatpush1.bf16.msra.mxu0 0
      %747 = vmatprep.subr.bf16.mxu0 0
      %748 = vmatpush1.bf16.msra.mxu0 0
      %749 = vmatprep.mubr.bf16.mxu0 0
      %750 = vmatmul.mubr.bf16.gmra.mrb[0].mxu0 %v664
      %v751 = vpop.f32.mrb[0].mxu0
      %v752 = vadd.f32 %v660, %v751
      %v753 = vpop.f32.mrb[0].mxu0
      %v754 = vpop.f32.mrb[0].mxu0
      %v755 = vpop.f32.mrb[0].mxu0
      %756 = vdwg.mxu0
      %v757 = vmax.f32 %v711, 0.0
      %v758 = vmax.f32 %v713, 0.0
      %v759 = vmax.f32 %v752, 0.0
      %760 = vst [vmem:[%s251] sm:$0xff] %v757
      %761 = vst [vmem:[%s251 + $0x8] sm:$0xff] %v758
      %762 = vst [vmem:[%s251 + $0x10] sm:$0xff] %v759
      %p763 = scmp.lt.s32.totalorder %s17, 1
      %s764 = scalar_select %p763, %s17, 1
      %s765 = smul.addr %s764, 3
      %s766 = smul.addr %s765, 8
      %s767 = scalar_lea.vmem %s6, %s766
      // Predicated region
      $region49: #{forward.1} parent=43 // pred_check
        %p768 = pneg %p166
      $region50: #{forward.1} parent=43 // pred_check_branch
        %770 = sbr.rel (%p768) target = $region52
      $region51: #{forward.1} parent=43 // pred_region
        _
      $region52: #{forward.1} parent=43 // pred_fallthru
        _
    $region44: #{forward.1} parent=5 // pred_fallthru
      _
    %p771 = scmp.le.s32.totalorder 2, %s12
    // Predicated region
    $region53: #{forward.1} parent=5 // pred_check
      %p772 = pneg %p771
    $region54: #{forward.1} parent=5 // pred_check_branch
      %774 = sbr.rel (%p772) target = $region56
    $region55: #{forward.1} parent=5 // pred_region
      %s775 = ssub.s32 %s12, 2
      // Predicated region
      $region57: #{forward.1} parent=55 // pred_check
        %p776 = pneg %p172
      $region58: #{forward.1} parent=55 // pred_check_branch
        %778 = sbr.rel (%p776) target = $region60
      $region59: #{forward.1} parent=55 // pred_region
        %p779 = scmp.lt.s32.totalorder %s18, 1
        %s780 = scalar_select %p779, %s18, 1
        %s781 = smul.addr %s780, 3
        %s782 = smul.addr %s781, 8
        %s783 = scalar_lea.vmem %s6, %s782
      $region60: #{forward.1} parent=55 // pred_fallthru
        _
    $region56: #{forward.1} parent=5 // pred_fallthru
      _
  $region6: #{forward.1} parent=0 // loop_footer
    %s16 = sadd.s32 1, %s12
  $region7: #{forward.1} parent=0 // loop_footer_branch
    %11 = sbr.rel target = $region3
  $region8: #{forward.1} parent=0 // loop_exit
    _

</llo_original>
